<compile_context>
chip_gen: v7x
topology: tpu7x:2x2x1
jax: 0.10.0
libtpu: 0.0.40
codegen_flags: <defaults>
</compile_context>

<pallas_src>
import functools

import jax
import jax.numpy as jnp
from jax import lax
from jax.experimental import pallas as pl
from jax.experimental.pallas import tpu as pltpu


def _round_up(x, m):
    return (x + m - 1) // m * m


def _cdiv(a, b):
    return (a + b - 1) // b


def _vmem_capacity_bytes():
    try:
        return int(pltpu.get_tpu_info().vmem_capacity_bytes)
    except Exception:
        return 64 << 20  # conservative default (v7x per-TC VMEM)


def _nw_kernel(w_ref, q_ref, k_ref, v_ref, o_ref, m_sc, d_sc, n_sc,
               *, n_k, tk, need_mask):
    # w_ref: SMEM (1,)                learnable scale
    # q_ref: VMEM (1, TQ)             queries (lane-dense)
    # k_ref: VMEM (TK, TQ)            keys^T block   (k rows on sublanes)
    # v_ref: VMEM (TK, TQ)            values^T block
    # o_ref: VMEM (1, TQ)             output (lane-dense slab)
    # m_sc/d_sc/n_sc: VMEM (1, TQ)    online-softmax running max / denom / num
    k_idx = pl.program_id(1)

    @pl.when(k_idx == 0)
    def _():
        m_sc[...] = jnp.full_like(m_sc, -jnp.inf)
        d_sc[...] = jnp.zeros_like(d_sc)
        n_sc[...] = jnp.zeros_like(n_sc)

    w = w_ref[0]
    q = q_ref[...]
    k = k_ref[...].astype(jnp.float32)
    v = v_ref[...].astype(jnp.float32)

    # scores = -((q - k) * w)^2 / 2   (broadcast of q along sublanes; pure VPU)
    diff = (q - k) * w
    s = -0.5 * (diff * diff)                              # (TK, TQ), <= 0

    if need_mask:
        # Rows past n_k (partial last k-block boundary reads) contribute 0.
        row = k_idx * tk + lax.broadcasted_iota(jnp.int32, s.shape, 0)
        s = jnp.where(row < n_k, s, -jnp.inf)

    # Online softmax update (sublane reductions -> XLU; one exp per element).
    m_prev = m_sc[...]
    m_new = jnp.maximum(m_prev, jnp.max(s, axis=0, keepdims=True))   # (1, TQ)
    alpha = jnp.exp(m_prev - m_new)                                   # (1, TQ)
    e = jnp.exp(s - m_new)                                            # (TK, TQ)
    d_sc[...] = alpha * d_sc[...] + jnp.sum(e, axis=0, keepdims=True)
    n_sc[...] = alpha * n_sc[...] + jnp.sum(e * v, axis=0, keepdims=True)
    m_sc[...] = m_new

    @pl.when(k_idx == pl.num_programs(1) - 1)
    def _():
        o_ref[...] = (n_sc[...] *
                      pl.reciprocal(d_sc[...], approx=False)).astype(o_ref.dtype)


def prepare_nw_inputs(queries, keys, values, kv_dtype=jnp.float32):
    """One-time layout prep (hoist out of the training step).

    Transposes K/V to the lane-dense (n_k, n_q) layout and pads the n_q axis
    up to a multiple of 128. In NW regression keys/values are constant across
    steps, so this extra HBM pass is paid once, not per forward call.
    """
    n_q, n_k = keys.shape
    n_q_pad = _round_up(max(n_q, 1), 128)
    pad = n_q_pad - n_q
    q_t = queries.astype(jnp.float32).reshape(1, n_q)
    k_t = keys.astype(kv_dtype).T            # (n_k, n_q)
    v_t = values.astype(kv_dtype).T          # (n_k, n_q)
    if pad:
        q_t = jnp.pad(q_t, ((0, 0), (0, pad)))
        k_t = jnp.pad(k_t, ((0, 0), (0, pad)))
        v_t = jnp.pad(v_t, ((0, 0), (0, pad)))
    return q_t, k_t, v_t, n_q


def _choose_tiling(n_q_pad, n_k, kv_itemsize):
    vmem_cap = _vmem_capacity_bytes()
    # Budget for the live, double-buffered K/V blocks: 2 arrays x 2 buffers.
    kv_budget = min(24 << 20, vmem_cap // 4)

    # First try full-n_k blocks (single k step): tq = budget / (4*itemsize*n_k).
    tq_full = (kv_budget // (4 * kv_itemsize * max(n_k, 1))) // 128 * 128
    if tq_full >= 128:
        tk = n_k
        tq = min(tq_full, 4096)
    else:
        # n_k too large for a full-extent block: engage k-blocking.
        tq = 512
        tk = max(8, (kv_budget // (4 * kv_itemsize * tq)) // 8 * 8)

    tq = min(tq, n_q_pad)
    # Guarantee >= 2 q-tiles when possible so the "parallel" axis can shard
    # across v7x's two TensorCores.
    if n_q_pad >= 256:
        tq = min(tq, _round_up(_cdiv(n_q_pad, 2), 128))

    grid_q = _cdiv(n_q_pad, tq)
    grid_k = _cdiv(n_k, tk)
    return tq, tk, grid_q, grid_k, vmem_cap


def nw_forward(w, q_t, k_t, v_t, n_q):
    """Pallas forward pass on prepared (lane-dense, padded) inputs."""
    n_k, n_q_pad = k_t.shape
    kv_itemsize = jnp.dtype(k_t.dtype).itemsize
    tq, tk, grid_q, grid_k, vmem_cap = _choose_tiling(n_q_pad, n_k, kv_itemsize)

    # Scoped-VMEM sizing: K/V double buffers + q/out blocks + scratch + slack.
    need = 4 * tk * tq * kv_itemsize + 9 * tq * 4
    vmem_limit = int(min(vmem_cap * 9 // 10,
                         max(32 << 20, need + (8 << 20))))

    cost = pl.CostEstimate(
        flops=10 * n_q_pad * n_k,
        transcendentals=n_q_pad * n_k,
        bytes_accessed=kv_itemsize * 2 * n_q_pad * n_k + 4 * 2 * n_q_pad,
    )

    kernel = functools.partial(
        _nw_kernel, n_k=n_k, tk=tk, need_mask=(tk * grid_k != n_k))

    out = pl.pallas_call(
        kernel,
        out_shape=jax.ShapeDtypeStruct((1, n_q_pad), jnp.float32),
        grid=(grid_q, grid_k),
        in_specs=[
            pl.BlockSpec(memory_space=pltpu.SMEM),          # w (scalar)
            pl.BlockSpec((1, tq), lambda i, k: (0, i)),     # queries (1, n_q_pad)
            pl.BlockSpec((tk, tq), lambda i, k: (k, i)),    # keys^T
            pl.BlockSpec((tk, tq), lambda i, k: (k, i)),    # values^T
        ],
        out_specs=pl.BlockSpec((1, tq), lambda i, k: (0, i)),
        scratch_shapes=[
            pltpu.VMEM((1, tq), jnp.float32),   # running max
            pltpu.VMEM((1, tq), jnp.float32),   # running denom
            pltpu.VMEM((1, tq), jnp.float32),   # running numerator
        ],
        compiler_params=pltpu.CompilerParams(
            dimension_semantics=("parallel", "arbitrary"),
            vmem_limit_bytes=vmem_limit,
        ),
        cost_estimate=cost,
    )(w.astype(jnp.float32), q_t, k_t, v_t)

    return out[0, :n_q]


def nw_kernel_regression(w, queries, keys, values, kv_dtype=jnp.float32):
    """Convenience one-shot wrapper (prepare + forward). For training loops,
    call prepare_nw_inputs once and nw_forward per step."""
    q_t, k_t, v_t, n_q = prepare_nw_inputs(queries, keys, values, kv_dtype)
    return nw_forward(w, q_t, k_t, v_t, n_q)


def _reference(w, queries, keys, values):
    # Pure-JAX reference mirroring the PyTorch module exactly.
    n_k = keys.shape[1]
    q = jnp.repeat(queries, n_k).reshape(-1, n_k)
    s = -((q - keys) * w[0]) ** 2 / 2
    attn = jax.nn.softmax(s, axis=1)
    return jnp.einsum("bk,bk->b", attn, values)


def _f(x):
    return 2.0 * jnp.sin(x) + x ** 0.8


if __name__ == "__main__":
    key = jax.random.PRNGKey(0)
    k_w, k_x, k_noise = jax.random.split(key, 3)

    # Shapes from the original script: x_test = arange(0, 5, 0.1), n_train = 50.
    n_train = 50
    x_test = jnp.arange(0, 5, 0.1, dtype=jnp.float32)
    n_test = x_test.shape[0]

    # Deterministic "training" data (same spirit as the PyTorch script).
    x_train = jnp.sort(jax.random.uniform(k_x, (n_train,)) * 5.0)
    y_train = _f(x_train) + 0.5 * jax.random.normal(k_noise, (n_train,))

    keys = jnp.tile(x_train[None, :], (n_test, 1))      # (n_test, n_train)
    values = jnp.tile(y_train[None, :], (n_test, 1))    # (n_test, n_train)

    # Parameter init: torch.rand((1,)) -> uniform [0, 1)
    w = jax.random.uniform(k_w, (1,), dtype=jnp.float32)

    # Hoisted layout prep (done once), then the Pallas forward pass.
    q_t, k_t, v_t, n_q = prepare_nw_inputs(x_test, keys, values)
    out = nw_forward(w, q_t, k_t, v_t, n_q)
    out = jax.block_until_ready(out)

    ref = _reference(w, x_test, keys, values)
    assert out.shape == (n_test,)
    assert jnp.allclose(out, ref, atol=1e-5, rtol=1e-5), (out, ref)

    print("KERNEL_OK")
</pallas_src>

<mosaic_0001>
module attributes {stable_mosaic.version = 11 : i64} {
  func.func @_nw_kernel(%arg0: i32, %arg1: i32, %arg2: memref<1xf32, #tpu.memory_space<smem>>, %arg3: memref<1x128xf32, #tpu.memory_space<vmem>>, %arg4: memref<50x128xf32, #tpu.memory_space<vmem>>, %arg5: memref<50x128xf32, #tpu.memory_space<vmem>>, %arg6: memref<1x128xf32, #tpu.memory_space<vmem>>, %arg7: memref<1x128xf32, #tpu.memory_space<vmem>>, %arg8: memref<1x128xf32, #tpu.memory_space<vmem>>, %arg9: memref<1x128xf32, #tpu.memory_space<vmem>>) attributes {dimension_semantics = [#tpu.dimension_semantics<parallel>, #tpu.dimension_semantics<arbitrary>], iteration_bounds = array<i64: 1, 1>, scalar_prefetch = 0 : i64, scratch_operands = 3 : i64, tpu.core_type = #tpu.core_type<tc>, window_params = [{transform_indices = @transform_0, window_bounds = array<i64: 1>}, {transform_indices = @transform_1, window_bounds = array<i64: 1, 128>}, {transform_indices = @transform_2, window_bounds = array<i64: 50, 128>}, {transform_indices = @transform_3, window_bounds = array<i64: 50, 128>}, {transform_indices = @transform_4, window_bounds = array<i64: 1, 128>}]} {
    %c0_i32 = arith.constant 0 : i32
    %0 = arith.cmpi eq, %arg1, %c0_i32 : i32
    %1 = arith.extui %0 : i1 to i32
    %c0_i32_0 = arith.constant 0 : i32
    %2 = arith.cmpi ne, %1, %c0_i32_0 : i32
    scf.if %2 {
      %cst_24 = arith.constant 0xFF800000 : f32
      %40 = vector.broadcast %cst_24 : f32 to vector<1x128xf32>
      %c0_25 = arith.constant 0 : index
      %c0_26 = arith.constant 0 : index
      %41 = vector.load %arg7[%c0_25, %c0_26] : memref<1x128xf32, #tpu.memory_space<vmem>>, vector<1x128xf32>
      tpu.vector_store %arg7[%c0_25, %c0_26], %40 {strides = array<i32>} : memref<1x128xf32, #tpu.memory_space<vmem>>, vector<1x128xf32>,
      %cst_27 = arith.constant 0.000000e+00 : f32
      %42 = vector.broadcast %cst_27 : f32 to vector<1x128xf32>
      %c0_28 = arith.constant 0 : index
      %c0_29 = arith.constant 0 : index
      %43 = vector.load %arg8[%c0_28, %c0_29] : memref<1x128xf32, #tpu.memory_space<vmem>>, vector<1x128xf32>
      tpu.vector_store %arg8[%c0_28, %c0_29], %42 {strides = array<i32>} : memref<1x128xf32, #tpu.memory_space<vmem>>, vector<1x128xf32>,
      %cst_30 = arith.constant 0.000000e+00 : f32
      %44 = vector.broadcast %cst_30 : f32 to vector<1x128xf32>
      %c0_31 = arith.constant 0 : index
      %c0_32 = arith.constant 0 : index
      %45 = vector.load %arg9[%c0_31, %c0_32] : memref<1x128xf32, #tpu.memory_space<vmem>>, vector<1x128xf32>
      tpu.vector_store %arg9[%c0_31, %c0_32], %44 {strides = array<i32>} : memref<1x128xf32, #tpu.memory_space<vmem>>, vector<1x128xf32>,
    } else {
    }
    %c0 = arith.constant 0 : index
    %3 = memref.load %arg2[%c0] : memref<1xf32, #tpu.memory_space<smem>>
    %c0_1 = arith.constant 0 : index
    %c0_2 = arith.constant 0 : index
    %4 = vector.load %arg3[%c0_1, %c0_2] : memref<1x128xf32, #tpu.memory_space<vmem>>, vector<1x128xf32>
    %c0_3 = arith.constant 0 : index
    %c0_4 = arith.constant 0 : index
    %5 = vector.load %arg4[%c0_3, %c0_4] : memref<50x128xf32, #tpu.memory_space<vmem>>, vector<50x128xf32>
    %c0_5 = arith.constant 0 : index
    %c0_6 = arith.constant 0 : index
    %6 = vector.load %arg5[%c0_5, %c0_6] : memref<50x128xf32, #tpu.memory_space<vmem>>, vector<50x128xf32>
    %7 = vector.broadcast %4 : vector<1x128xf32> to vector<50x128xf32>
    %8 = arith.subf %7, %5 : vector<50x128xf32>
    %9 = vector.broadcast %3 : f32 to vector<50x128xf32>
    %10 = arith.mulf %8, %9 : vector<50x128xf32>
    %11 = arith.mulf %10, %10 : vector<50x128xf32>
    %cst = arith.constant -5.000000e-01 : f32
    %12 = vector.broadcast %cst : f32 to vector<50x128xf32>
    %13 = arith.mulf %12, %11 : vector<50x128xf32>
    %c0_7 = arith.constant 0 : index
    %c0_8 = arith.constant 0 : index
    %14 = vector.load %arg7[%c0_7, %c0_8] : memref<1x128xf32, #tpu.memory_space<vmem>>, vector<1x128xf32>
    %cst_9 = arith.constant dense<0xFF800000> : vector<128xf32>
    %15 = vector.multi_reduction <maximumf>, %13, %cst_9 [0] : vector<50x128xf32> to vector<128xf32>
    %16 = vector.shape_cast %15 : vector<128xf32> to vector<1x128xf32>
    %17 = arith.maximumf %14, %16 : vector<1x128xf32>
    %18 = arith.subf %14, %17 : vector<1x128xf32>
    %19 = math.exp %18 : vector<1x128xf32>
    %20 = vector.broadcast %17 : vector<1x128xf32> to vector<50x128xf32>
    %21 = arith.subf %13, %20 : vector<50x128xf32>
    %22 = math.exp %21 : vector<50x128xf32>
    %c0_10 = arith.constant 0 : index
    %c0_11 = arith.constant 0 : index
    %23 = vector.load %arg8[%c0_10, %c0_11] : memref<1x128xf32, #tpu.memory_space<vmem>>, vector<1x128xf32>
    %24 = arith.mulf %19, %23 : vector<1x128xf32>
    %cst_12 = arith.constant dense<0.000000e+00> : vector<128xf32>
    %25 = vector.multi_reduction <add>, %22, %cst_12 [0] : vector<50x128xf32> to vector<128xf32>
    %26 = vector.shape_cast %25 : vector<128xf32> to vector<1x128xf32>
    %27 = arith.addf %24, %26 : vector<1x128xf32>
    %c0_13 = arith.constant 0 : index
    %c0_14 = arith.constant 0 : index
    %28 = vector.load %arg8[%c0_13, %c0_14] : memref<1x128xf32, #tpu.memory_space<vmem>>, vector<1x128xf32>
    tpu.vector_store %arg8[%c0_13, %c0_14], %27 {strides = array<i32>} : memref<1x128xf32, #tpu.memory_space<vmem>>, vector<1x128xf32>,
    %c0_15 = arith.constant 0 : index
    %c0_16 = arith.constant 0 : index
    %29 = vector.load %arg9[%c0_15, %c0_16] : memref<1x128xf32, #tpu.memory_space<vmem>>, vector<1x128xf32>
    %30 = arith.mulf %19, %29 : vector<1x128xf32>
    %31 = arith.mulf %22, %6 : vector<50x128xf32>
    %cst_17 = arith.constant dense<0.000000e+00> : vector<128xf32>
    %32 = vector.multi_reduction <add>, %31, %cst_17 [0] : vector<50x128xf32> to vector<128xf32>
    %33 = vector.shape_cast %32 : vector<128xf32> to vector<1x128xf32>
    %34 = arith.addf %30, %33 : vector<1x128xf32>
    %c0_18 = arith.constant 0 : index
    %c0_19 = arith.constant 0 : index
    %35 = vector.load %arg9[%c0_18, %c0_19] : memref<1x128xf32, #tpu.memory_space<vmem>>, vector<1x128xf32>
    tpu.vector_store %arg9[%c0_18, %c0_19], %34 {strides = array<i32>} : memref<1x128xf32, #tpu.memory_space<vmem>>, vector<1x128xf32>,
    %c0_20 = arith.constant 0 : index
    %c0_21 = arith.constant 0 : index
    %36 = vector.load %arg7[%c0_20, %c0_21] : memref<1x128xf32, #tpu.memory_space<vmem>>, vector<1x128xf32>
    tpu.vector_store %arg7[%c0_20, %c0_21], %17 {strides = array<i32>} : memref<1x128xf32, #tpu.memory_space<vmem>>, vector<1x128xf32>,
    %c0_i32_22 = arith.constant 0 : i32
    %37 = arith.cmpi eq, %arg1, %c0_i32_22 : i32
    %38 = arith.extui %37 : i1 to i32
    %c0_i32_23 = arith.constant 0 : i32
    %39 = arith.cmpi ne, %38, %c0_i32_23 : i32
    scf.if %39 {
      %c0_24 = arith.constant 0 : index
      %c0_25 = arith.constant 0 : index
      %40 = vector.load %arg9[%c0_24, %c0_25] : memref<1x128xf32, #tpu.memory_space<vmem>>, vector<1x128xf32>
      %c0_26 = arith.constant 0 : index
      %c0_27 = arith.constant 0 : index
      %41 = vector.load %arg8[%c0_26, %c0_27] : memref<1x128xf32, #tpu.memory_space<vmem>>, vector<1x128xf32>
      %42 = tpu.reciprocal %41 : vector<1x128xf32> -> vector<1x128xf32>
      %43 = arith.mulf %40, %42 : vector<1x128xf32>
      %c0_28 = arith.constant 0 : index
      %c0_29 = arith.constant 0 : index
      %44 = vector.load %arg6[%c0_28, %c0_29] : memref<1x128xf32, #tpu.memory_space<vmem>>, vector<1x128xf32>
      tpu.vector_store %arg6[%c0_28, %c0_29], %43 {strides = array<i32>} : memref<1x128xf32, #tpu.memory_space<vmem>>, vector<1x128xf32>,
    } else {
    }
    return
  }
  func.func @transform_0(%arg0: i32, %arg1: i32) -> i32 {
    %c0_i32 = arith.constant 0 : i32
    %c0_i32_0 = arith.constant 0 : i32
    return %c0_i32 : i32
  }
  func.func @transform_1(%arg0: i32, %arg1: i32) -> (i32, i32) {
    %c0_i32 = arith.constant 0 : i32
    %c0_i32_0 = arith.constant 0 : i32
    return %c0_i32, %arg0 : i32, i32
  }
  func.func @transform_2(%arg0: i32, %arg1: i32) -> (i32, i32) {
    %c0_i32 = arith.constant 0 : i32
    return %arg1, %arg0 : i32, i32
  }
  func.func @transform_3(%arg0: i32, %arg1: i32) -> (i32, i32) {
    %c0_i32 = arith.constant 0 : i32
    return %arg1, %arg0 : i32, i32
  }
  func.func @transform_4(%arg0: i32, %arg1: i32) -> (i32, i32) {
    %c0_i32 = arith.constant 0 : i32
    %c0_i32_0 = arith.constant 0 : i32
    return %c0_i32, %arg0 : i32, i32
  }
}

</mosaic_0001>

<llo_original>
// kernel: tpu_custom_call.1
$region0: #{tpu_custom_call.1}
  #allocation0 [shape = 'u32[]', space=smem, size = 0x4, offset = 0x4, fixed_abs, tag = 'smem constant byte address 0x4 - core index']
  #allocation1 [shape = 'u32[144,128]{1,0:T(1,128)}', space=vmem, size = 0x12000, scoped, tag = 'internal scratch']
  #allocation2 [shape = 'f32[1,128]{1,0:T(1,128)}', space=vmem, size = 0x200, scoped, tag = 'scratch operand']
  #allocation3 [shape = 'f32[1,128]{1,0:T(1,128)}', space=vmem, size = 0x200, scoped, tag = 'scratch operand']
  #allocation4 [shape = 'f32[1,128]{1,0:T(1,128)}', space=vmem, size = 0x200, scoped, tag = 'scratch operand']
  #allocation5 [shape = 'f32[1]{0:T(128)S(6)}', space=smem, size = 0x200, scoped, tag = 'scoped memory for tpu_custom_call.1']
  %s0 = inlined_call_operand.<no memory space> [shape: f32[1], index: 0, kind: input, shape index: {}]
  %s1 = inlined_call_operand.vmem [shape: f32[1,128], index: 1, kind: input, shape index: {}]
  %s2 = inlined_call_operand.hbm [shape: f32[50,128], index: 2, kind: input, shape index: {}]
  %s3 = inlined_call_operand.hbm [shape: f32[50,128], index: 3, kind: input, shape index: {}]
  %s4 = inlined_call_operand.hbm [shape: f32[1,128], index: 4, kind: output, shape index: {}]
  %s5 = sld [smem:[#allocation0]]
  $region42: #{tpu_custom_call.1} parent=0
    _
  %s7 = ssub.s32 1, %s5
  %s8 = scalar_select 0, %s7, %s5
  %9 = sst [smem:[#allocation5]] %s0
  $region1: #{tpu_custom_call.1} parent=0
    #allocation6 [shape = 'u8[28672]{0}', space=vmem, size = 0x7000, scoped, tag = 'input window, operand 2, single buffered']
    #allocation7 [shape = 's32[1]{0}', space=sflag, size = 0x4, scoped, tag = 'scoped memory for tpu_custom_call.1']
    #allocation8 [shape = 's32[1]{0}', space=sflag, size = 0x4, scoped, tag = 'scoped memory for tpu_custom_call.1']
    #allocation9 [shape = 'u8[28672]{0}', space=vmem, size = 0x7000, scoped, tag = 'input window, operand 3, single buffered']
    #allocation10 [shape = 's32[1]{0}', space=sflag, size = 0x4, scoped, tag = 'scoped memory for tpu_custom_call.1']
    #allocation11 [shape = 'u8[512]{0}', space=vmem, size = 0x400, scoped, tag = 'output window, operand 0, single buffered']
    %10 = vsyncpa [#allocation7], 0
    %11 = vsyncpa [#allocation10], 0
    %12 = vsyncpa [#allocation8], 0
    // Predicated region
    $region2: #{tpu_custom_call.1} parent=1 // pred_check
      _
    $region3: #{tpu_custom_call.1} parent=1 // pred_check_branch
      %14 = sbr.rel (0) target = $region5
    $region4: #{tpu_custom_call.1} parent=1 // pred_region
      _
    $region5: #{tpu_custom_call.1} parent=1 // pred_fallthru
      _
    // Predicated region
    $region6: #{tpu_custom_call.1} parent=1 // pred_check
      _
    $region7: #{tpu_custom_call.1} parent=1 // pred_check_branch
      %16 = sbr.rel (0) target = $region9
    $region8: #{tpu_custom_call.1} parent=1 // pred_region
      _
    $region9: #{tpu_custom_call.1} parent=1 // pred_fallthru
      _
    // Predicated region
    $region10: #{tpu_custom_call.1} parent=1 // pred_check
      _
    $region11: #{tpu_custom_call.1} parent=1 // pred_check_branch
      %18 = sbr.rel (0) target = $region13
    $region12: #{tpu_custom_call.1} parent=1 // pred_region
      %s20 = ssub.s32 896, 896
      %21 = vsyncadd [#allocation7], %s20
      %s22 = sshll.u32 [#allocation6], 4
      %s23 = int_to_ptr.vmem [resolvable:$true] %s22
      %28 = dma.hbm_to_vmem [thread:$0]  %s2, 896, %s23, [#allocation7], 128, 128, 8
    $region13: #{tpu_custom_call.1} parent=1 // pred_fallthru
      _
    // Predicated region
    $region14: #{tpu_custom_call.1} parent=1 // pred_check
      _
    $region15: #{tpu_custom_call.1} parent=1 // pred_check_branch
      %30 = sbr.rel (0) target = $region17
    $region16: #{tpu_custom_call.1} parent=1 // pred_region
      %s32 = ssub.s32 896, 896
      %33 = vsyncadd [#allocation10], %s32
      %s34 = sshll.u32 [#allocation9], 4
      %s35 = int_to_ptr.vmem [resolvable:$true] %s34
      %40 = dma.hbm_to_vmem [thread:$0]  %s3, 896, %s35, [#allocation10], 128, 128, 8
    $region17: #{tpu_custom_call.1} parent=1 // pred_fallthru
      _
    // Predicated region
    $region18: #{tpu_custom_call.1} parent=1 // pred_check
      _
    $region19: #{tpu_custom_call.1} parent=1 // pred_check_branch
      %42 = sbr.rel (0) target = $region21
    $region20: #{tpu_custom_call.1} parent=1 // pred_region
      %43 = dma.done [#allocation7], 896
    $region21: #{tpu_custom_call.1} parent=1 // pred_fallthru
      _
    // Predicated region
    $region22: #{tpu_custom_call.1} parent=1 // pred_check
      _
    $region23: #{tpu_custom_call.1} parent=1 // pred_check_branch
      %45 = sbr.rel (0) target = $region25
    $region24: #{tpu_custom_call.1} parent=1 // pred_region
      %46 = dma.done [#allocation10], 896
    $region25: #{tpu_custom_call.1} parent=1 // pred_fallthru
      _
    %p47 = scmp.eq.s32.totalorder 0, 0
    // Predicated region
    $region26: #{tpu_custom_call.1} parent=1 // pred_check
      %p48 = pneg %p47
    $region27: #{tpu_custom_call.1} parent=1 // pred_check_branch
      %50 = sbr.rel (%p48) target = $region29
    $region28: #{tpu_custom_call.1} parent=1 // pred_region
      %51 = vst [vmem:[#allocation2] sm:$0x1] -inf
      %52 = vst [vmem:[#allocation3] sm:$0x1] 0.0
      %53 = vst [vmem:[#allocation4] sm:$0x1] 0.0
    $region29: #{tpu_custom_call.1} parent=1 // pred_fallthru
      _
    %s54 = sld [smem:[#allocation5]]
    %v55 = vld [vmem:[%s1] sm:$0x1]
    %v56 = vld [vmem:[#allocation6] sm:$0xff]
    %v57 = vld [vmem:[#allocation6 + $0x8] sm:$0xff]
    %v58 = vld [vmem:[#allocation6 + $0x10] sm:$0xff]
    %v59 = vld [vmem:[#allocation6 + $0x18] sm:$0xff]
    %v60 = vld [vmem:[#allocation6 + $0x20] sm:$0xff]
    %v61 = vld [vmem:[#allocation6 + $0x28] sm:$0xff]
    %v62 = vld [vmem:[#allocation6 + $0x30] sm:$0x3]
    %v63 = vld [vmem:[#allocation9] sm:$0xff]
    %v64 = vld [vmem:[#allocation9 + $0x8] sm:$0xff]
    %v65 = vld [vmem:[#allocation9 + $0x10] sm:$0xff]
    %v66 = vld [vmem:[#allocation9 + $0x18] sm:$0xff]
    %v67 = vld [vmem:[#allocation9 + $0x20] sm:$0xff]
    %v68 = vld [vmem:[#allocation9 + $0x28] sm:$0xff]
    %v69 = vld [vmem:[#allocation9 + $0x30] sm:$0x3]
    %v71 = vlaneseq
    %v72 = vshrl.u32 %v71, 7
    %v73 = vsub.s32 0, %v72
    %v74 = vrot.slane %v55, %v73
    %v76 = vsub.f32 %v74, %v56
    %v77 = vsub.f32 %v74, %v57
    %v78 = vsub.f32 %v74, %v58
    %v79 = vsub.f32 %v74, %v59
    %v80 = vsub.f32 %v74, %v60
    %v81 = vsub.f32 %v74, %v61
    %v82 = vsub.f32 %v74, %v62
    %v83 = vstv %s54
    %v84 = vmul.f32 %v76, %v83
    %v85 = vmul.f32 %v77, %v83
    %v86 = vmul.f32 %v78, %v83
    %v87 = vmul.f32 %v79, %v83
    %v88 = vmul.f32 %v80, %v83
    %v89 = vmul.f32 %v81, %v83
    %v90 = vmul.f32 %v82, %v83
    %v91 = vmul.f32 %v84, %v84
    %v92 = vmul.f32 %v85, %v85
    %v93 = vmul.f32 %v86, %v86
    %v94 = vmul.f32 %v87, %v87
    %v95 = vmul.f32 %v88, %v88
    %v96 = vmul.f32 %v89, %v89
    %v97 = vmul.f32 %v90, %v90
    %v98 = vmul.f32 %v91, -0.5
    %v99 = vmul.f32 %v92, -0.5
    %v100 = vmul.f32 %v93, -0.5
    %v101 = vmul.f32 %v94, -0.5
    %v102 = vmul.f32 %v95, -0.5
    %v103 = vmul.f32 %v96, -0.5
    %v104 = vmul.f32 %v97, -0.5
    %v105 = vld [vmem:[#allocation2] sm:$0x1]
    %v106 = vmax.f32 %v98, %v102
    %v107 = vmax.f32 %v99, %v103
    %vm108 = vcmask 1041408
    %v109 = vsel %vm108, %v104, -inf
    %v110 = vmax.f32 %v100, %v109
    %v111 = vmax.f32 %v106, %v107
    %v112 = vmax.f32 %v110, %v101
    %v113 = vmax.f32 %v111, %v112
    %v114 = vrot.slane %v113, 4
    %v115 = vmax.f32 %v113, %v114
    %v116 = vrot.slane %v115, 2
    %v117 = vmax.f32 %v115, %v116
    %v118 = vrot.slane %v117, 1
    %v119 = vmax.f32 %v117, %v118
    %v120 = vmax.f32 %v105, %v119
    %v121 = vsub.f32 %v105, %v120
    %v122 = vmul.f32 %v121, 1.442695
    %v123 = vpow.pop %v122
    %v125 = vlaneseq
    %v126 = vshrl.u32 %v125, 7
    %v127 = vsub.s32 0, %v126
    %v128 = vrot.slane %v120, %v127
    %v130 = vsub.f32 %v98, %v128
    %v131 = vsub.f32 %v99, %v128
    %v132 = vsub.f32 %v100, %v128
    %v133 = vsub.f32 %v101, %v128
    %v134 = vsub.f32 %v102, %v128
    %v135 = vsub.f32 %v103, %v128
    %v136 = vsub.f32 %v104, %v128
    %v137 = vmul.f32 %v130, 1.442695
    %v138 = vpow.pop %v137
    %v139 = vmul.f32 %v131, 1.442695
    %v140 = vpow.pop %v139
    %v141 = vmul.f32 %v132, 1.442695
    %v142 = vpow.pop %v141
    %v143 = vmul.f32 %v133, 1.442695
    %v144 = vpow.pop %v143
    %v145 = vmul.f32 %v134, 1.442695
    %v146 = vpow.pop %v145
    %v147 = vmul.f32 %v135, 1.442695
    %v148 = vpow.pop %v147
    %v149 = vmul.f32 %v136, 1.442695
    %v150 = vpow.pop %v149
    %v151 = vld [vmem:[#allocation3] sm:$0x1]
    %v152 = vmul.f32 %v123, %v151
    %v153 = vadd.f32 %v138, %v140
    %v154 = vadd.f32 %v153, %v142
    %v155 = vadd.f32 %v154, %v144
    %v156 = vadd.f32 %v155, %v146
    %v157 = vadd.f32 %v156, %v148
    %v158 = vsel %vm108, %v150, 0.0
    %v159 = vadd.f32 %v157, %v158
    %v160 = vrot.slane %v159, 4
    %v161 = vadd.f32 %v159, %v160
    %v162 = vrot.slane %v161, 2
    %v163 = vadd.f32 %v161, %v162
    %v164 = vrot.slane %v163, 1
    %v165 = vadd.f32 %v163, %v164
    %v166 = vadd.f32 %v152, %v165
    %167 = vst [vmem:[#allocation3] sm:$0x1] %v166
    %v168 = vld [vmem:[#allocation4] sm:$0x1]
    %v169 = vmul.f32 %v123, %v168
    %v170 = vmul.f32 %v138, %v63
    %v171 = vmul.f32 %v140, %v64
    %v172 = vmul.f32 %v142, %v65
    %v173 = vmul.f32 %v144, %v66
    %v174 = vmul.f32 %v146, %v67
    %v175 = vmul.f32 %v148, %v68
    %v176 = vmul.f32 %v150, %v69
    %v177 = vadd.f32 %v170, %v171
    %v178 = vadd.f32 %v177, %v172
    %v179 = vadd.f32 %v178, %v173
    %v180 = vadd.f32 %v179, %v174
    %v181 = vadd.f32 %v180, %v175
    %v182 = vsel %vm108, %v176, 0.0
    %v183 = vadd.f32 %v181, %v182
    %v184 = vrot.slane %v183, 4
    %v185 = vadd.f32 %v183, %v184
    %v186 = vrot.slane %v185, 2
    %v187 = vadd.f32 %v185, %v186
    %v188 = vrot.slane %v187, 1
    %v189 = vadd.f32 %v187, %v188
    %v190 = vadd.f32 %v169, %v189
    %191 = vst [vmem:[#allocation4] sm:$0x1] %v190
    %192 = vst [vmem:[#allocation2] sm:$0x1] %v120
    // Predicated region
    $region30: #{tpu_custom_call.1} parent=1 // pred_check
      %p193 = pneg %p47
    $region31: #{tpu_custom_call.1} parent=1 // pred_check_branch
      %195 = sbr.rel (%p193) target = $region33
    $region32: #{tpu_custom_call.1} parent=1 // pred_region
      %v196 = vld [vmem:[#allocation4] sm:$0x1]
      %v197 = vld [vmem:[#allocation3] sm:$0x1]
      %v198 = vrcp.pop %v197
      %v199 = vmul.f32 %v196, %v198
      %200 = vst [vmem:[#allocation11] sm:$0x1] %v199
    $region33: #{tpu_custom_call.1} parent=1 // pred_fallthru
      _
    // Predicated region
    $region34: #{tpu_custom_call.1} parent=1 // pred_check
      _
    $region35: #{tpu_custom_call.1} parent=1 // pred_check_branch
      %202 = sbr.rel (0) target = $region37
    $region36: #{tpu_custom_call.1} parent=1 // pred_region
      %s204 = ssub.s32 16, 16
      %205 = vsyncadd [#allocation8], %s204
      %s207 = sshll.u32 [#allocation11], 4
      %s208 = int_to_ptr.vmem [resolvable:$true] %s207
      %210 = dma.vmem_to_hbm [thread:$0]  %s208, 16, %s4, [#allocation8]
    $region37: #{tpu_custom_call.1} parent=1 // pred_fallthru
      _
    // Predicated region
    $region38: #{tpu_custom_call.1} parent=1 // pred_check
      _
    $region39: #{tpu_custom_call.1} parent=1 // pred_check_branch
      %212 = sbr.rel (0) target = $region41
    $region40: #{tpu_custom_call.1} parent=1 // pred_region
      %213 = dma.done [#allocation8], 16
    $region41: #{tpu_custom_call.1} parent=1 // pred_fallthru
      _
    %214 = vsyncpa [#allocation7], 1
    %215 = vsyncpa [#allocation10], 1
    %216 = vsyncpa [#allocation8], 1

</llo_original>
